<compile_context>
chip_gen: v7x
topology: tpu7x:2x2x1
jax: 0.10.0
libtpu: 0.0.40
codegen_flags: <defaults>
</compile_context>

<pallas_src>
import jax
import jax.numpy as jnp
from jax.experimental import pallas as pl
from jax.experimental.pallas import tpu as pltpu

LANE = 128
_MAX_TILE_N = 2048  # rows per grid step for the context encoder


def _round_up(v, m):
    return ((v + m - 1) // m) * m


def _pad2(a, rows, cols):
    r, c = a.shape
    return jnp.pad(a, ((0, rows - r), (0, cols - c)))


def _pad_lanes(dim):
    # <=128 -> 128 (v5e MXU is 4x128x128); >128 -> multiple of 256 (v6e/v7x MXU).
    if dim <= LANE:
        return LANE
    return _round_up(dim, 256)


# ----------------------------------------------------------------------------
# Kernels
# ----------------------------------------------------------------------------
def _context_encoder_kernel(xy_ref, w1_ref, b1_ref, w2_ref, b2_ref, d_ref):
    # layer 1 (f32, tiny K): (tile_n, ctx_in_p) @ (ctx_in_p, hp)
    h = jnp.dot(xy_ref[...], w1_ref[...], preferred_element_type=jnp.float32)
    h = jnp.maximum(h + b1_ref[...], 0.0)                       # f32 ReLU on VPU
    # layer 2 (bf16 MXU inputs, f32 accumulate): (tile_n, hp) @ (hp, d_dim)
    d = jnp.dot(h.astype(jnp.bfloat16), w2_ref[...],
                preferred_element_type=jnp.float32)
    d_ref[...] = (d + b2_ref[...]).astype(d_ref.dtype)


def _y0_encoder_kernel(y0_ref, w1_ref, b1_ref, w2_ref, b2_ref, l_ref):
    h = jnp.dot(y0_ref[...], w1_ref[...], preferred_element_type=jnp.float32)
    h = jnp.maximum(h + b1_ref[...], 0.0)
    l = jnp.dot(h.astype(jnp.bfloat16), w2_ref[...],
                preferred_element_type=jnp.float32)
    l_ref[...] = (l + b2_ref[...]).astype(l_ref.dtype)


# ----------------------------------------------------------------------------
# Parameter preparation (done once, outside the hot path):
#   * hidden padded to MXU-friendly lane width (zero cols/rows -> exact math)
#   * concat feature axis padded to a sublane multiple
#   * layer-2 weights cast to bf16; layer-1 weights stay f32
#   * outputs stay at their exact widths (l_dim, d_dim): no padded writeback
# ----------------------------------------------------------------------------
def prepare_params(params):
    hidden = params["y0_w1"].shape[1]
    y_dim = params["y0_w1"].shape[0]
    ctx_in = params["ctx_w1"].shape[0]          # x_dim + y_dim
    l_dim = params["y0_w2"].shape[1]
    d_dim = params["ctx_w2"].shape[1]
    hp = _pad_lanes(hidden)
    ctx_in_p = _round_up(ctx_in, 8)

    prep = {
        "y0_w1": _pad2(params["y0_w1"], y_dim, hp),
        "y0_b1": _pad2(params["y0_b1"], 1, hp),
        "y0_w2": _pad2(params["y0_w2"], hp, l_dim).astype(jnp.bfloat16),
        "y0_b2": params["y0_b2"],
        "ctx_w1": _pad2(params["ctx_w1"], ctx_in_p, hp),
        "ctx_b1": _pad2(params["ctx_b1"], 1, hp),
        "ctx_w2": _pad2(params["ctx_w2"], hp, d_dim).astype(jnp.bfloat16),
        "ctx_b2": params["ctx_b2"],
    }
    meta = {"ctx_in": ctx_in, "ctx_in_p": ctx_in_p, "l_dim": l_dim, "d_dim": d_dim}
    return prep, meta


# ----------------------------------------------------------------------------
# Y0ContextNDPEncoder forward
# ----------------------------------------------------------------------------
def y0_context_ndp_encoder_forward(prep, meta, x, y, y0):
    """
    x  : (batch*num_points, x_dim)
    y  : (batch*num_points, y_dim)
    y0 : (batch, y_dim)
    returns (L_output, D_output)
    """
    n = x.shape[0]
    batch = y0.shape[0]
    l_dim = meta["l_dim"]
    d_dim = meta["d_dim"]
    ctx_in = meta["ctx_in"]
    ctx_in_p = meta["ctx_in_p"]

    # One-time concat (+ sublane pad): a single lane-contiguous input stream
    # and a single layer-1 matmul instead of two K=4/K=3 ones.
    xy = jnp.concatenate([x, y], axis=-1)
    if ctx_in_p != ctx_in:
        xy = jnp.pad(xy, ((0, 0), (0, ctx_in_p - ctx_in)))

    # Row tile: exact for small n, capped at 2048 so large batch*num_points
    # streams through double-buffered VMEM tiles.
    tile_n = min(_MAX_TILE_N, _round_up(n, 8))
    grid = (pl.cdiv(n, tile_n),)

    def const(arr):
        nd = arr.ndim
        return pl.BlockSpec(arr.shape, lambda i, _nd=nd: (0,) * _nd)

    # ---- context encoder: row-parallel grid over batch*num_points -----------
    d_out = pl.pallas_call(
        _context_encoder_kernel,
        out_shape=jax.ShapeDtypeStruct((n, d_dim), jnp.float32),
        grid=grid,
        in_specs=[
            pl.BlockSpec((tile_n, ctx_in_p), lambda i: (i, 0)),   # xy (streamed)
            const(prep["ctx_w1"]), const(prep["ctx_b1"]),         # weights (resident)
            const(prep["ctx_w2"]), const(prep["ctx_b2"]),
        ],
        out_specs=pl.BlockSpec((tile_n, d_dim), lambda i: (i, 0)),  # D (streamed, exact width)
        compiler_params=pltpu.CompilerParams(
            dimension_semantics=("parallel",),   # row grid shards across TCs on v7x
            vmem_limit_bytes=32 * 1024 * 1024,   # budget valid on v5e/v6e/v7x
        ),
    )(xy, prep["ctx_w1"], prep["ctx_b1"], prep["ctx_w2"], prep["ctx_b2"])

    # ---- y0 encoder: tiny (batch x l_dim), single invocation, whole arrays --
    l_out = pl.pallas_call(
        _y0_encoder_kernel,
        out_shape=jax.ShapeDtypeStruct((batch, l_dim), jnp.float32),
    )(y0, prep["y0_w1"], prep["y0_b1"], prep["y0_w2"], prep["y0_b2"])

    return l_out, d_out


# ----------------------------------------------------------------------------
# Init / reference
# ----------------------------------------------------------------------------
def init_params(key, x_dim, y_dim, hidden, l_dim, d_dim):
    ks = jax.random.split(key, 8)

    def lin_w(k, fan_in, fan_out):
        bound = 1.0 / jnp.sqrt(float(fan_in))
        return jax.random.uniform(k, (fan_in, fan_out), jnp.float32, -bound, bound)

    def lin_b(k, fan_in, fan_out):
        bound = 1.0 / jnp.sqrt(float(fan_in))
        return jax.random.uniform(k, (1, fan_out), jnp.float32, -bound, bound)

    return {
        "y0_w1": lin_w(ks[0], y_dim, hidden),
        "y0_b1": lin_b(ks[1], y_dim, hidden),
        "y0_w2": lin_w(ks[2], hidden, l_dim),
        "y0_b2": lin_b(ks[3], hidden, l_dim),
        "ctx_w1": lin_w(ks[4], x_dim + y_dim, hidden),
        "ctx_b1": lin_b(ks[5], x_dim + y_dim, hidden),
        "ctx_w2": lin_w(ks[6], hidden, d_dim),
        "ctx_b2": lin_b(ks[7], hidden, d_dim),
    }


def _reference_forward(params, x, y, y0):
    """Pure-JAX f32 reference for correctness checking."""
    def mlp(a, w1, b1, w2, b2):
        h = jnp.maximum(a @ w1 + b1, 0.0)
        return h @ w2 + b2
    L = mlp(y0, params["y0_w1"], params["y0_b1"], params["y0_w2"], params["y0_b2"])
    D = mlp(jnp.concatenate([x, y], -1),
            params["ctx_w1"], params["ctx_b1"], params["ctx_w2"], params["ctx_b2"])
    return L, D


if __name__ == "__main__":
    batch = 2
    num_points = 8
    x_dim = 4
    y_dim = 3
    hidden = 32
    l_dim = 8   # latent L(0) representation dim
    d_dim = 8   # context D representation dim

    key = jax.random.PRNGKey(0)
    k_params, k_x, k_y, k_y0 = jax.random.split(key, 4)

    params = init_params(k_params, x_dim, y_dim, hidden, l_dim, d_dim)
    prep, meta = prepare_params(params)

    x = jax.random.normal(k_x, (batch * num_points, x_dim), jnp.float32)
    y = jax.random.normal(k_y, (batch * num_points, y_dim), jnp.float32)
    y0 = jax.random.normal(k_y0, (batch, y_dim), jnp.float32)

    L_out, D_out = y0_context_ndp_encoder_forward(prep, meta, x, y, y0)
    jax.block_until_ready((L_out, D_out))

    # Sanity check against pure-JAX f32 reference (layer-2 uses bf16 MXU inputs
    # -> relaxed tolerance).
    L_ref, D_ref = _reference_forward(params, x, y, y0)
    assert L_out.shape == (batch, l_dim)
    assert D_out.shape == (batch * num_points, d_dim)
    assert jnp.allclose(L_out, L_ref, atol=5e-2, rtol=5e-2)
    assert jnp.allclose(D_out, D_ref, atol=5e-2, rtol=5e-2)

    print("KERNEL_OK")
</pallas_src>

<mosaic_0001>
module attributes {stable_mosaic.version = 11 : i64} {
  func.func @_context_encoder_kernel(%arg0: i32, %arg1: memref<16x8xf32, #tpu.memory_space<vmem>>, %arg2: memref<8x128xf32, #tpu.memory_space<vmem>>, %arg3: memref<1x128xf32, #tpu.memory_space<vmem>>, %arg4: memref<128x8xbf16, #tpu.memory_space<vmem>>, %arg5: memref<1x8xf32, #tpu.memory_space<vmem>>, %arg6: memref<16x8xf32, #tpu.memory_space<vmem>>) attributes {dimension_semantics = [#tpu.dimension_semantics<parallel>], iteration_bounds = array<i64: 1>, scalar_prefetch = 0 : i64, scratch_operands = 0 : i64, tpu.core_type = #tpu.core_type<tc>, window_params = [{transform_indices = @transform_0, window_bounds = array<i64: 16, 8>}, {pipeline_mode = #tpu.pipeline_mode<synchronous>, transform_indices = @transform_1, window_bounds = array<i64: 8, 128>}, {pipeline_mode = #tpu.pipeline_mode<synchronous>, transform_indices = @transform_2, window_bounds = array<i64: 1, 128>}, {pipeline_mode = #tpu.pipeline_mode<synchronous>, transform_indices = @transform_3, window_bounds = array<i64: 128, 8>}, {pipeline_mode = #tpu.pipeline_mode<synchronous>, transform_indices = @transform_4, window_bounds = array<i64: 1, 8>}, {transform_indices = @transform_5, window_bounds = array<i64: 16, 8>}]} {
    %c0 = arith.constant 0 : index
    %c0_0 = arith.constant 0 : index
    %0 = vector.load %arg1[%c0, %c0_0] : memref<16x8xf32, #tpu.memory_space<vmem>>, vector<16x8xf32>
    %c0_1 = arith.constant 0 : index
    %c0_2 = arith.constant 0 : index
    %1 = vector.load %arg2[%c0_1, %c0_2] : memref<8x128xf32, #tpu.memory_space<vmem>>, vector<8x128xf32>
    %cst = arith.constant dense<0.000000e+00> : vector<16x128xf32>
    %2 = tpu.matmul %0, %1, %cst {dimension_numbers = #tpu.dot_dimension_numbers<[1], [0], [0], [1], [0, 0, 1, 1], [], []>} : vector<16x8xf32>, vector<8x128xf32>, vector<16x128xf32> -> vector<16x128xf32>
    %c0_3 = arith.constant 0 : index
    %c0_4 = arith.constant 0 : index
    %3 = vector.load %arg3[%c0_3, %c0_4] : memref<1x128xf32, #tpu.memory_space<vmem>>, vector<1x128xf32>
    %4 = vector.broadcast %3 : vector<1x128xf32> to vector<16x128xf32>
    %5 = arith.addf %2, %4 : vector<16x128xf32>
    %cst_5 = arith.constant 0.000000e+00 : f32
    %6 = vector.broadcast %cst_5 : f32 to vector<16x128xf32>
    %7 = arith.maximumf %5, %6 : vector<16x128xf32>
    %8 = arith.truncf %7 : vector<16x128xf32> to vector<16x128xbf16>
    %c0_6 = arith.constant 0 : index
    %c0_7 = arith.constant 0 : index
    %9 = vector.load %arg4[%c0_6, %c0_7] : memref<128x8xbf16, #tpu.memory_space<vmem>>, vector<128x8xbf16>
    %cst_8 = arith.constant dense<0.000000e+00> : vector<16x8xf32>
    %10 = tpu.matmul %8, %9, %cst_8 {dimension_numbers = #tpu.dot_dimension_numbers<[1], [0], [0], [1], [0, 0, 1, 1], [], []>} : vector<16x128xbf16>, vector<128x8xbf16>, vector<16x8xf32> -> vector<16x8xf32>
    %c0_9 = arith.constant 0 : index
    %c0_10 = arith.constant 0 : index
    %11 = vector.load %arg5[%c0_9, %c0_10] : memref<1x8xf32, #tpu.memory_space<vmem>>, vector<1x8xf32>
    %12 = vector.broadcast %11 : vector<1x8xf32> to vector<16x8xf32>
    %13 = arith.addf %10, %12 : vector<16x8xf32>
    %c0_11 = arith.constant 0 : index
    %c0_12 = arith.constant 0 : index
    %14 = vector.load %arg6[%c0_11, %c0_12] : memref<16x8xf32, #tpu.memory_space<vmem>>, vector<16x8xf32>
    tpu.vector_store %arg6[%c0_11, %c0_12], %13 {strides = array<i32>} : memref<16x8xf32, #tpu.memory_space<vmem>>, vector<16x8xf32>,
    return
  }
  func.func @transform_0(%arg0: i32) -> (i32, i32) {
    %c0_i32 = arith.constant 0 : i32
    %c0_i32_0 = arith.constant 0 : i32
    return %arg0, %c0_i32 : i32, i32
  }
  func.func @transform_1(%arg0: i32) -> (i32, i32) {
    %c0_i32 = arith.constant 0 : i32
    %c0_i32_0 = arith.constant 0 : i32
    %c0_i32_1 = arith.constant 0 : i32
    return %c0_i32, %c0_i32_0 : i32, i32
  }
  func.func @transform_2(%arg0: i32) -> (i32, i32) {
    %c0_i32 = arith.constant 0 : i32
    %c0_i32_0 = arith.constant 0 : i32
    %c0_i32_1 = arith.constant 0 : i32
    return %c0_i32, %c0_i32_0 : i32, i32
  }
  func.func @transform_3(%arg0: i32) -> (i32, i32) {
    %c0_i32 = arith.constant 0 : i32
    %c0_i32_0 = arith.constant 0 : i32
    %c0_i32_1 = arith.constant 0 : i32
    return %c0_i32, %c0_i32_0 : i32, i32
  }
  func.func @transform_4(%arg0: i32) -> (i32, i32) {
    %c0_i32 = arith.constant 0 : i32
    %c0_i32_0 = arith.constant 0 : i32
    %c0_i32_1 = arith.constant 0 : i32
    return %c0_i32, %c0_i32_0 : i32, i32
  }
  func.func @transform_5(%arg0: i32) -> (i32, i32) {
    %c0_i32 = arith.constant 0 : i32
    %c0_i32_0 = arith.constant 0 : i32
    return %arg0, %c0_i32 : i32, i32
  }
}

</mosaic_0001>

<llo_original>
// kernel: tpu_custom_call.1
$region0: #{tpu_custom_call.1}
  #allocation0 [shape = 'u32[]', space=smem, size = 0x4, offset = 0x4, fixed_abs, tag = 'smem constant byte address 0x4 - core index']
  #allocation1 [shape = 'u32[144,128]{1,0:T(1,128)}', space=vmem, size = 0x12000, scoped, tag = 'internal scratch']
  %s0 = inlined_call_operand.vmem [shape: f32[16,8], index: 0, kind: input, shape index: {}]
  %s1 = inlined_call_operand.vmem [shape: f32[8,128], index: 1, kind: input, shape index: {}]
  %s2 = inlined_call_operand.vmem [shape: f32[1,128], index: 2, kind: input, shape index: {}]
  %s3 = inlined_call_operand.vmem [shape: bf16[128,8], index: 3, kind: input, shape index: {}]
  %s4 = inlined_call_operand.vmem [shape: f32[1,8], index: 4, kind: input, shape index: {}]
  %s5 = inlined_call_operand.vmem [shape: f32[16,8], index: 5, kind: output, shape index: {}]
  %s6 = sld [smem:[#allocation0]]
  $region30: #{tpu_custom_call.1} parent=0
    _
  %s8 = ssub.s32 1, %s6
  %s9 = scalar_select 0, %s8, %s6
  // Predicated region
  $region2: #{tpu_custom_call.1} parent=0 // pred_check
    _
  $region3: #{tpu_custom_call.1} parent=0 // pred_check_branch
    %11 = sbr.rel (0) target = $region5
  $region4: #{tpu_custom_call.1} parent=0 // pred_region
    _
  $region5: #{tpu_custom_call.1} parent=0 // pred_fallthru
    _
  // Predicated region
  $region6: #{tpu_custom_call.1} parent=0 // pred_check
    _
  $region7: #{tpu_custom_call.1} parent=0 // pred_check_branch
    %13 = sbr.rel (0) target = $region9
  $region8: #{tpu_custom_call.1} parent=0 // pred_region
    _
  $region9: #{tpu_custom_call.1} parent=0 // pred_fallthru
    _
  // Predicated region
  $region10: #{tpu_custom_call.1} parent=0 // pred_check
    _
  $region11: #{tpu_custom_call.1} parent=0 // pred_check_branch
    %15 = sbr.rel (0) target = $region13
  $region12: #{tpu_custom_call.1} parent=0 // pred_region
    _
  $region13: #{tpu_custom_call.1} parent=0 // pred_fallthru
    _
  // Predicated region
  $region14: #{tpu_custom_call.1} parent=0 // pred_check
    _
  $region15: #{tpu_custom_call.1} parent=0 // pred_check_branch
    %17 = sbr.rel (0) target = $region17
  $region16: #{tpu_custom_call.1} parent=0 // pred_region
    _
  $region17: #{tpu_custom_call.1} parent=0 // pred_fallthru
    _
  // Predicated region
  $region18: #{tpu_custom_call.1} parent=0 // pred_check
    _
  $region19: #{tpu_custom_call.1} parent=0 // pred_check_branch
    %19 = sbr.rel (0) target = $region21
  $region20: #{tpu_custom_call.1} parent=0 // pred_region
    _
  $region21: #{tpu_custom_call.1} parent=0 // pred_fallthru
    _
  %v21 = vld [vmem:[%s0] sm:$0xff]
  %v22 = vld [vmem:[%s0 + $0x8] sm:$0xff]
  %v23 = vld [vmem:[%s1] sm:$0xff]
  %v24 = vld [vmem:[%s2] sm:$0x1]
  %v26 = vlaneseq
  %v27 = vshrl.u32 %v26, 7
  %v28 = vsub.s32 0, %v27
  %v29 = vrot.slane %v24, %v28
  %vm31 = vcmask 64512
  %v33 = vsel %vm31, %v21, 0
  %v36 = vsel %vm31, %v22, 0
  %38 = vmatprep.subr.mxu0 0.0
  %39 = vmatpush1.msra.mxu0 %v23
  %40 = vmatprep.subr.mxu0 0.0
  %41 = vmatpush1.msra.mxu0 0.0
  %42 = vmatprep.subr.mxu0 0.0
  %43 = vmatpush1.msra.mxu0 0.0
  %44 = vmatprep.subr.mxu0 0.0
  %45 = vmatpush1.msra.mxu0 0.0
  %46 = vmatprep.subr.mxu0 0.0
  %47 = vmatpush1.msra.mxu0 0.0
  %48 = vmatprep.subr.mxu0 0.0
  %49 = vmatpush1.msra.mxu0 0.0
  %50 = vmatprep.subr.mxu0 0.0
  %51 = vmatpush1.msra.mxu0 0.0
  %52 = vmatprep.subr.mxu0 0.0
  %53 = vmatpush1.msra.mxu0 0.0
  %54 = vmatprep.subr.mxu0 0.0
  %55 = vmatpush1.msra.mxu0 0.0
  %56 = vmatprep.subr.mxu0 0.0
  %57 = vmatpush1.msra.mxu0 0.0
  %58 = vmatprep.subr.mxu0 0.0
  %59 = vmatpush1.msra.mxu0 0.0
  %60 = vmatprep.subr.mxu0 0.0
  %61 = vmatpush1.msra.mxu0 0.0
  %62 = vmatprep.subr.mxu0 0.0
  %63 = vmatpush1.msra.mxu0 0.0
  %64 = vmatprep.subr.mxu0 0.0
  %65 = vmatpush1.msra.mxu0 0.0
  %66 = vmatprep.subr.mxu0 0.0
  %67 = vmatpush1.msra.mxu0 0.0
  %68 = vmatprep.subr.mxu0 0.0
  %69 = vmatpush1.msra.mxu0 0.0
  %70 = vmatprep.subr.mxu0 0.0
  %71 = vmatpush1.msra.mxu0 0.0
  %72 = vmatprep.subr.mxu0 0.0
  %73 = vmatpush1.msra.mxu0 0.0
  %74 = vmatprep.subr.mxu0 0.0
  %75 = vmatpush1.msra.mxu0 0.0
  %76 = vmatprep.subr.mxu0 0.0
  %77 = vmatpush1.msra.mxu0 0.0
  %78 = vmatprep.subr.mxu0 0.0
  %79 = vmatpush1.msra.mxu0 0.0
  %80 = vmatprep.subr.mxu0 0.0
  %81 = vmatpush1.msra.mxu0 0.0
  %82 = vmatprep.subr.mxu0 0.0
  %83 = vmatpush1.msra.mxu0 0.0
  %84 = vmatprep.subr.mxu0 0.0
  %85 = vmatpush1.msra.mxu0 0.0
  %86 = vmatprep.subr.mxu0 0.0
  %87 = vmatpush1.msra.mxu0 0.0
  %88 = vmatprep.subr.mxu0 0.0
  %89 = vmatpush1.msra.mxu0 0.0
  %90 = vmatprep.subr.mxu0 0.0
  %91 = vmatpush1.msra.mxu0 0.0
  %92 = vmatprep.subr.mxu0 0.0
  %93 = vmatpush1.msra.mxu0 0.0
  %94 = vmatprep.subr.mxu0 0.0
  %95 = vmatpush1.msra.mxu0 0.0
  %96 = vmatprep.subr.mxu0 0.0
  %97 = vmatpush1.msra.mxu0 0.0
  %98 = vmatprep.subr.mxu0 0.0
  %99 = vmatpush1.msra.mxu0 0.0
  %100 = vmatprep.subr.mxu0 0.0
  %101 = vmatpush1.msra.mxu0 0.0
  %102 = vmatprep.mubr.f32.mxu0 0.0
  %103 = vmatmul.mubr.f32.gmra.mrb[0].mxu0 %v33
  %v104 = vpop.f32.mrb[0].mxu0
  %v105 = vadd.f32 %v29, %v104
  %v106 = vpop.f32.mrb[0].mxu0
  %107 = vmatprep.mubr.f32.mxu0 0.0
  %108 = vmatmul.mubr.f32.gmra.mrb[0].mxu0 %v36
  %v109 = vpop.f32.mrb[0].mxu0
  %v110 = vadd.f32 %v29, %v109
  %v111 = vpop.f32.mrb[0].mxu0
  %112 = vdwg.mxu0
  %v113 = vmax.f32 %v105, 0.0
  %v114 = vmax.f32 %v110, 0.0
  %v115 = vpack.c.bf16 %v114, %v113
  %v116 = vld [vmem:[%s3] sm:$0xf]
  %v117 = vld [vmem:[%s3 + $0x4] sm:$0xf]
  %v118 = vld [vmem:[%s3 + $0x8] sm:$0xf]
  %v119 = vld [vmem:[%s3 + $0xc] sm:$0xf]
  %v120 = vld [vmem:[%s3 + $0x10] sm:$0xf]
  %v121 = vld [vmem:[%s3 + $0x14] sm:$0xf]
  %v122 = vld [vmem:[%s3 + $0x18] sm:$0xf]
  %v123 = vld [vmem:[%s3 + $0x1c] sm:$0xf]
  %v124 = vld [vmem:[%s3 + $0x20] sm:$0xf]
  %v125 = vld [vmem:[%s3 + $0x24] sm:$0xf]
  %v126 = vld [vmem:[%s3 + $0x28] sm:$0xf]
  %v127 = vld [vmem:[%s3 + $0x2c] sm:$0xf]
  %v128 = vld [vmem:[%s3 + $0x30] sm:$0xf]
  %v129 = vld [vmem:[%s3 + $0x34] sm:$0xf]
  %v130 = vld [vmem:[%s3 + $0x38] sm:$0xf]
  %v131 = vld [vmem:[%s3 + $0x3c] sm:$0xf]
  %v132 = vld [vmem:[%s4] sm:$0x1]
  %v134 = vlaneseq
  %v135 = vshrl.u32 %v134, 7
  %v136 = vsub.s32 0, %v135
  %v137 = vrot.slane %v132, %v136
  %v155 = vunpack.c.l.b16 %v116
  %v156 = vunpack.c.l.b16 %v117
  %v157 = vunpack.c.l.b16 %v118
  %v158 = vunpack.c.l.b16 %v119
  %v159 = vunpack.c.l.b16 %v120
  %v160 = vunpack.c.l.b16 %v121
  %v161 = vunpack.c.l.b16 %v122
  %v162 = vunpack.c.l.b16 %v123
  %v163 = vunpack.c.l.b16 %v124
  %v164 = vunpack.c.l.b16 %v125
  %v165 = vunpack.c.l.b16 %v126
  %v166 = vunpack.c.l.b16 %v127
  %v167 = vunpack.c.l.b16 %v128
  %v168 = vunpack.c.l.b16 %v129
  %v169 = vunpack.c.l.b16 %v130
  %v170 = vunpack.c.l.b16 %v131
  %v171 = vpack.c.b16 %v156, %v155
  %v172 = vpack.c.b16 %v158, %v157
  %v173 = vpack.c.b16 %v160, %v159
  %v174 = vpack.c.b16 %v162, %v161
  %v175 = vpack.c.b16 %v164, %v163
  %v176 = vpack.c.b16 %v166, %v165
  %v177 = vpack.c.b16 %v168, %v167
  %v178 = vpack.c.b16 %v170, %v169
  %187 = vmatprep.subr.bf16.mxu0 0
  %188 = vmatpush1.bf16.msra.mxu0 %v171
  %189 = vmatprep.subr.bf16.mxu0 0
  %190 = vmatpush1.bf16.msra.mxu0 %v172
  %191 = vmatprep.subr.bf16.mxu0 0
  %192 = vmatpush1.bf16.msra.mxu0 %v173
  %193 = vmatprep.subr.bf16.mxu0 0
  %194 = vmatpush1.bf16.msra.mxu0 %v174
  %195 = vmatprep.subr.bf16.mxu0 0
  %196 = vmatpush1.bf16.msra.mxu0 %v175
  %197 = vmatprep.subr.bf16.mxu0 0
  %198 = vmatpush1.bf16.msra.mxu0 %v176
  %199 = vmatprep.subr.bf16.mxu0 0
  %200 = vmatpush1.bf16.msra.mxu0 %v177
  %201 = vmatprep.subr.bf16.mxu0 0
  %202 = vmatpush1.bf16.msra.mxu0 %v178
  %203 = vmatprep.subr.bf16.mxu0 0
  %204 = vmatpush1.bf16.msra.mxu0 0
  %205 = vmatprep.subr.bf16.mxu0 0
  %206 = vmatpush1.bf16.msra.mxu0 0
  %207 = vmatprep.subr.bf16.mxu0 0
  %208 = vmatpush1.bf16.msra.mxu0 0
  %209 = vmatprep.subr.bf16.mxu0 0
  %210 = vmatpush1.bf16.msra.mxu0 0
  %211 = vmatprep.subr.bf16.mxu0 0
  %212 = vmatpush1.bf16.msra.mxu0 0
  %213 = vmatprep.subr.bf16.mxu0 0
  %214 = vmatpush1.bf16.msra.mxu0 0
  %215 = vmatprep.subr.bf16.mxu0 0
  %216 = vmatpush1.bf16.msra.mxu0 0
  %217 = vmatprep.subr.bf16.mxu0 0
  %218 = vmatpush1.bf16.msra.mxu0 0
  %219 = vmatprep.mubr.bf16.mxu0 0
  %220 = vmatmul.mubr.bf16.gmra.mrb[0].mxu0 %v115
  %v221 = vpop.f32.mrb[0].mxu0
  %v222 = vadd.f32 %v137, %v221
  %v223 = vpop.f32.mrb[0].mxu0
  %v224 = vpop.f32.mrb[0].mxu0
  %v225 = vadd.f32 %v137, %v224
  %v226 = vpop.f32.mrb[0].mxu0
  %227 = vdwg.mxu0
  %228 = vst.msk [vmem:[%s5] sm:$0xff] %vm31, %v222
  %229 = vst.msk [vmem:[%s5 + $0x8] sm:$0xff] %vm31, %v225
  // Predicated region
  $region22: #{tpu_custom_call.1} parent=0 // pred_check
    _
  $region23: #{tpu_custom_call.1} parent=0 // pred_check_branch
    %231 = sbr.rel (0) target = $region25
  $region24: #{tpu_custom_call.1} parent=0 // pred_region
    _
  $region25: #{tpu_custom_call.1} parent=0 // pred_fallthru
    _
  // Predicated region
  $region26: #{tpu_custom_call.1} parent=0 // pred_check
    _
  $region27: #{tpu_custom_call.1} parent=0 // pred_check_branch
    %233 = sbr.rel (0) target = $region29
  $region28: #{tpu_custom_call.1} parent=0 // pred_region
    _
  $region29: #{tpu_custom_call.1} parent=0 // pred_fallthru
    _

</llo_original>
